<compile_context>
chip_gen: v7x
topology: tpu7x:2x2x1
jax: 0.10.0
libtpu: 0.0.40
codegen_flags: <defaults>
</compile_context>

<pallas_src>
import functools
import math

import numpy as np
import jax
import jax.numpy as jnp
from jax.experimental import pallas as pl
from jax.experimental.pallas import tpu as pltpu


def _round_up(x, m):
    return (x + m - 1) // m * m


# --------------------------------------------------------------------------------------
# Fused GEMM kernels (conv-as-matmul with BN/bias/SiLU/residual epilogue)
# --------------------------------------------------------------------------------------

def _gemm_kernel(a_ref, w_ref, b_ref, o_ref, acc_ref, *, act):
    k = pl.program_id(2)

    @pl.when(k == 0)
    def _():
        acc_ref[...] = jnp.zeros_like(acc_ref)

    acc_ref[...] += jnp.dot(a_ref[...], w_ref[...], preferred_element_type=jnp.float32)

    @pl.when(k == pl.num_programs(2) - 1)
    def _():
        out = acc_ref[...] + b_ref[...]
        if act == "silu":
            out = out * (1.0 / (1.0 + jnp.exp(-out)))
        o_ref[...] = out.astype(o_ref.dtype)


def _gemm_res_kernel(a_ref, w_ref, b_ref, r_ref, o_ref, acc_ref):
    k = pl.program_id(2)

    @pl.when(k == 0)
    def _():
        acc_ref[...] = jnp.zeros_like(acc_ref)

    acc_ref[...] += jnp.dot(a_ref[...], w_ref[...], preferred_element_type=jnp.float32)

    @pl.when(k == pl.num_programs(2) - 1)
    def _():
        o_ref[...] = (acc_ref[...] + b_ref[...] + r_ref[...]).astype(o_ref.dtype)


def _pick_tiles(M, N, K):
    # M tile: right-size for tiny M in the deep layers instead of padding to 128/256.
    if M >= 256:
        tm = 256
    elif M >= 128:
        tm = 128
    else:
        tm = _round_up(M, 8)
    mp = _round_up(M, tm)
    # N tile: lane-dense output (128/256 lanes).
    np_pad = _round_up(N, 128)
    tn = 256 if (np_pad % 256 == 0 and np_pad >= 256) else 128
    # K tile: no zero-padding of small K up to a fixed 256; single k-step when K <= 1024.
    if K <= 1024:
        kp = _round_up(K, 8)
        tk = kp
    else:
        kp = _round_up(K, 128)
        if kp % 512 == 0:
            tk = 512
        elif kp % 256 == 0:
            tk = 256
        else:
            tk = 128
    return tm, tn, tk, mp, np_pad, kp


def _gemm(a, w, bias, *, act="none", residual=None):
    """act(a @ w + bias [+ residual]); bf16 operands, f32 MXU accumulation & epilogue."""
    M, K = a.shape
    N = w.shape[1]
    tm, tn, tk, Mp, Np, Kp = _pick_tiles(M, N, K)
    a_p = jnp.pad(a.astype(jnp.bfloat16), ((0, Mp - M), (0, Kp - K)))
    w_p = jnp.pad(w.astype(jnp.bfloat16), ((0, Kp - K), (0, Np - N)))
    b_p = jnp.pad(bias.astype(jnp.float32).reshape(1, N), ((0, 0), (0, Np - N)))

    in_specs = [
        pl.BlockSpec((tm, tk), lambda i, j, k: (i, k)),
        pl.BlockSpec((tk, tn), lambda i, j, k: (k, j)),
        pl.BlockSpec((1, tn), lambda i, j, k: (0, j)),
    ]
    args = [a_p, w_p, b_p]
    if residual is not None:
        r_p = jnp.pad(residual.astype(jnp.float32), ((0, Mp - M), (0, Np - N)))
        in_specs.append(pl.BlockSpec((tm, tn), lambda i, j, k: (i, j)))
        args.append(r_p)
        kernel = _gemm_res_kernel
    else:
        kernel = functools.partial(_gemm_kernel, act=act)

    cost = pl.CostEstimate(
        flops=2 * M * N * K,
        transcendentals=M * N if act == "silu" else 0,
        bytes_accessed=2 * (Mp * Kp + Kp * Np)
        + 4 * Mp * Np * (2 if residual is not None else 1),
    )
    out = pl.pallas_call(
        kernel,
        out_shape=jax.ShapeDtypeStruct((Mp, Np), jnp.float32),
        grid_spec=pltpu.PrefetchScalarGridSpec(
            num_scalar_prefetch=0,
            grid=(Mp // tm, Np // tn, Kp // tk),
            in_specs=in_specs,
            out_specs=pl.BlockSpec((tm, tn), lambda i, j, k: (i, j)),
            scratch_shapes=[pltpu.VMEM((tm, tn), jnp.float32)],
        ),
        compiler_params=pltpu.CompilerParams(
            dimension_semantics=("parallel", "parallel", "arbitrary")
        ),
        cost_estimate=cost,
    )(*args)
    return out[:M, :N]


# --------------------------------------------------------------------------------------
# Conv wrappers (im2col glue + GEMM)
# --------------------------------------------------------------------------------------

def _im2col(x, kh, kw, stride, pad):
    """NHWC im2col; output last dim ordered (ki, kj, c)."""
    B, H, W, C = x.shape
    if pad:
        x = jnp.pad(x, ((0, 0), (pad, pad), (pad, pad), (0, 0)))
    Hp, Wp = H + 2 * pad, W + 2 * pad
    Ho = (Hp - kh) // stride + 1
    Wo = (Wp - kw) // stride + 1
    cols = []
    for i in range(kh):
        hi = i + stride * (Ho - 1) + 1
        for j in range(kw):
            wj = j + stride * (Wo - 1) + 1
            cols.append(x[:, i:hi:stride, j:wj:stride, :])
    patches = jnp.concatenate(cols, axis=-1) if len(cols) > 1 else cols[0]
    return patches, Ho, Wo


@functools.partial(jax.jit, static_argnames=("kh", "kw", "stride", "pad", "act"))
def conv_bn(x, w, bias, *, kh, kw, stride, pad, act):
    """Dense conv (BN folded) + activation.  w is PyTorch layout (Cout, Cin, kh, kw)."""
    B, H, W, Cin = x.shape
    Cout = w.shape[0]
    wk = jnp.transpose(w, (2, 3, 1, 0)).reshape(kh * kw * Cin, Cout)
    patches, Ho, Wo = _im2col(x, kh, kw, stride, pad)
    a = patches.reshape(B * Ho * Wo, kh * kw * Cin)
    y = _gemm(a, wk, bias, act=act)
    return y.reshape(B, Ho, Wo, Cout)


@functools.partial(jax.jit, static_argnames=("act",))
def conv1x1_bn(x, w, bias, *, act):
    B, H, W, Cin = x.shape
    Cout = w.shape[0]
    wk = jnp.transpose(w.reshape(Cout, Cin), (1, 0))
    y = _gemm(x.reshape(B * H * W, Cin), wk, bias, act=act)
    return y.reshape(B, H, W, Cout)


@jax.jit
def conv1x1_bn_add(x, w, bias, residual):
    """1x1 projection conv (BN folded) fused with the MBConv residual add (no activation)."""
    B, H, W, Cin = x.shape
    Cout = w.shape[0]
    wk = jnp.transpose(w.reshape(Cout, Cin), (1, 0))
    r = residual.reshape(B * H * W, Cout)
    y = _gemm(x.reshape(B * H * W, Cin), wk, bias, act="none", residual=r)
    return y.reshape(B, H, W, Cout)


# --------------------------------------------------------------------------------------
# Depthwise conv (VPU: k*k fused multiply-adds over full-channel lanes) + BN + SiLU
# --------------------------------------------------------------------------------------

def _depthwise_kernel(xt_ref, wt_ref, b_ref, o_ref, *, taps):
    acc = xt_ref[0] * wt_ref[0]
    for t in range(1, taps):
        acc = acc + xt_ref[t] * wt_ref[t]
    out = acc + b_ref[...]
    o_ref[...] = out * (1.0 / (1.0 + jnp.exp(-out)))


@functools.partial(jax.jit, static_argnames=("k", "stride"))
def depthwise_conv_bn_silu(x, w, bias, *, k, stride):
    """Depthwise kxk conv (groups=C, BN folded) + SiLU.  w is PyTorch layout (C, 1, k, k)."""
    B, H, W, C = x.shape
    pad = (k - 1) // 2
    xp = jnp.pad(x, ((0, 0), (pad, pad), (pad, pad), (0, 0)))
    Ho = (H + 2 * pad - k) // stride + 1
    Wo = (W + 2 * pad - k) // stride + 1
    taps = []
    for i in range(k):
        hi = i + stride * (Ho - 1) + 1
        for j in range(k):
            wj = j + stride * (Wo - 1) + 1
            taps.append(xp[:, i:hi:stride, j:wj:stride, :])
    T = k * k
    M = B * Ho * Wo
    xt = jnp.stack(taps, 0).reshape(T, M, C)
    wt = jnp.transpose(w.reshape(C, T), (1, 0)).reshape(T, 1, C)

    # Row tile sized to ~2 MiB of VMEM per input block.
    tm_budget = max(8, ((2 * 1024 * 1024) // (T * C * 4)) // 8 * 8)
    tm = min(256, _round_up(M, 8), tm_budget)
    Mp = _round_up(M, tm)
    xt = jnp.pad(xt, ((0, 0), (0, Mp - M), (0, 0)))

    y = pl.pallas_call(
        functools.partial(_depthwise_kernel, taps=T),
        out_shape=jax.ShapeDtypeStruct((Mp, C), jnp.float32),
        grid=(Mp // tm,),
        in_specs=[
            pl.BlockSpec((T, tm, C), lambda i: (0, i, 0)),
            pl.BlockSpec((T, 1, C), lambda i: (0, 0, 0)),
            pl.BlockSpec((1, C), lambda i: (0, 0)),
        ],
        out_specs=pl.BlockSpec((tm, C), lambda i: (i, 0)),
        compiler_params=pltpu.CompilerParams(dimension_semantics=("parallel",)),
    )(xt, wt, bias.reshape(1, C))
    return y[:M].reshape(B, Ho, Wo, C)


# --------------------------------------------------------------------------------------
# Squeeze-Excitation: fused pool -> FC+SiLU -> FC+sigmoid -> channel rescale
# --------------------------------------------------------------------------------------

def _se_kernel(x_ref, w1_ref, b1_ref, w2_ref, b2_ref, o_ref):
    x = x_ref[...]                                        # (B, HW, C)
    pooled = jnp.sum(x, axis=1) * (1.0 / x.shape[1])      # (B, C)
    h = jnp.dot(pooled, w1_ref[...], preferred_element_type=jnp.float32) + b1_ref[...]
    h = h * (1.0 / (1.0 + jnp.exp(-h)))                   # SiLU
    s = jnp.dot(h, w2_ref[...], preferred_element_type=jnp.float32) + b2_ref[...]
    gate = 1.0 / (1.0 + jnp.exp(-s))                      # sigmoid, (B, C)
    o_ref[...] = x * gate[:, None, :]


@jax.jit
def squeeze_excite(x, w1, b1, w2, b2):
    """torchvision SqueezeExcitation; fc1/fc2 are 1x1 convs with bias (PyTorch layouts)."""
    B, H, W, C = x.shape
    Csq = w1.shape[0]
    xr = x.reshape(B, H * W, C)
    w1m = jnp.transpose(w1.reshape(Csq, C), (1, 0))       # (C, Csq)
    w2m = jnp.transpose(w2.reshape(C, Csq), (1, 0))       # (Csq, C)
    y = pl.pallas_call(
        _se_kernel,
        out_shape=jax.ShapeDtypeStruct((B, H * W, C), jnp.float32),
        grid=(1,),
        in_specs=[
            pl.BlockSpec((B, H * W, C), lambda i: (0, 0, 0)),
            pl.BlockSpec((C, Csq), lambda i: (0, 0)),
            pl.BlockSpec((1, Csq), lambda i: (0, 0)),
            pl.BlockSpec((Csq, C), lambda i: (0, 0)),
            pl.BlockSpec((1, C), lambda i: (0, 0)),
        ],
        out_specs=pl.BlockSpec((B, H * W, C), lambda i: (0, 0, 0)),
    )(xr, w1m, b1.reshape(1, Csq), w2m, b2.reshape(1, C))
    return y.reshape(B, H, W, C)


# --------------------------------------------------------------------------------------
# Global average pool + classifier
# --------------------------------------------------------------------------------------

def _mean_pool_kernel(x_ref, o_ref):
    o_ref[...] = jnp.sum(x_ref[...], axis=1) * (1.0 / x_ref.shape[1])


@jax.jit
def global_mean_pool(x):
    B, H, W, C = x.shape
    xr = x.reshape(B, H * W, C)
    return pl.pallas_call(
        _mean_pool_kernel,
        out_shape=jax.ShapeDtypeStruct((B, C), jnp.float32),
        grid=(1,),
        in_specs=[pl.BlockSpec((B, H * W, C), lambda i: (0, 0, 0))],
        out_specs=pl.BlockSpec((B, C), lambda i: (0, 0)),
    )(xr)


@jax.jit
def linear(x, w, b):
    return _gemm(x, w, b, act="none")


# --------------------------------------------------------------------------------------
# EfficientNet-B7 configuration & deterministic synthetic parameters (BN folded)
# --------------------------------------------------------------------------------------

_B7_WIDTH_MULT = 2.0
_B7_DEPTH_MULT = 3.1
# (expand_ratio, kernel, stride, base_in, base_out, base_layers) -- EfficientNet-B0 table
_B7_BASE_CFG = [
    (1, 3, 1, 32, 16, 1),
    (6, 3, 2, 16, 24, 2),
    (6, 5, 2, 24, 40, 2),
    (6, 3, 2, 40, 80, 3),
    (6, 5, 1, 80, 112, 3),
    (6, 5, 2, 112, 192, 4),
    (6, 3, 1, 192, 320, 1),
]


def _make_divisible(v, divisor=8):
    new_v = max(divisor, int(v + divisor / 2) // divisor * divisor)
    if new_v < 0.9 * v:
        new_v += divisor
    return new_v


def _adjust_channels(c):
    return _make_divisible(c * _B7_WIDTH_MULT)


def _adjust_depth(n):
    return int(math.ceil(n * _B7_DEPTH_MULT))


def _bn_fold(key, c):
    k1, k2, k3, k4 = jax.random.split(key, 4)
    gamma = 1.0 + 0.1 * jax.random.normal(k1, (c,), jnp.float32)
    beta = 0.1 * jax.random.normal(k2, (c,), jnp.float32)
    mean = 0.1 * jax.random.normal(k3, (c,), jnp.float32)
    var = 1.0 + 0.1 * jax.random.uniform(k4, (c,), jnp.float32)
    scale = gamma * jax.lax.rsqrt(var + 1e-5)
    return scale, beta - mean * scale


def _conv_bn_params(key, cout, cin, k):
    k1, k2 = jax.random.split(key)
    fan_in = cin * k * k
    w = jax.random.normal(k1, (cout, cin, k, k), jnp.float32) * np.sqrt(1.0 / fan_in)
    scale, bias = _bn_fold(k2, cout)
    return w * scale[:, None, None, None], bias


def _dwconv_bn_params(key, c, k):
    k1, k2 = jax.random.split(key)
    w = jax.random.normal(k1, (c, 1, k, k), jnp.float32) * np.sqrt(1.0 / (k * k))
    scale, bias = _bn_fold(k2, c)
    return w * scale[:, None, None, None], bias


def _mbconv_params(key, in_ch, out_ch, expand_ratio, k, stride):
    expanded = _make_divisible(in_ch * expand_ratio)
    sq = max(1, in_ch // 4)
    keys = jax.random.split(key, 8)
    p = {"k": k, "stride": stride, "use_res": (stride == 1 and in_ch == out_ch)}
    if expanded != in_ch:
        p["exp_w"], p["exp_b"] = _conv_bn_params(keys[0], expanded, in_ch, 1)
    p["dw_w"], p["dw_b"] = _dwconv_bn_params(keys[1], expanded, k)
    p["se_w1"] = jax.random.normal(keys[2], (sq, expanded, 1, 1), jnp.float32) * np.sqrt(1.0 / expanded)
    p["se_b1"] = 0.01 * jax.random.normal(keys[3], (sq,), jnp.float32)
    p["se_w2"] = jax.random.normal(keys[4], (expanded, sq, 1, 1), jnp.float32) * np.sqrt(1.0 / sq)
    p["se_b2"] = 1.0 + 0.1 * jax.random.normal(keys[5], (expanded,), jnp.float32)
    p["proj_w"], p["proj_b"] = _conv_bn_params(keys[6], out_ch, expanded, 1)
    return p


def init_efficientnet_b7(key, num_classes=2):
    keys = jax.random.split(key, 8)
    params = {}
    stem_out = _adjust_channels(32)  # 64
    # Replaced stem: Conv2d(1, 64, 3x3, stride 2, pad 1, bias=False) + BN + SiLU.
    params["stem_w"], params["stem_b"] = _conv_bn_params(keys[0], stem_out, 1, 3)

    blocks = []
    in_ch = stem_out
    for si, (er, k, s, _, co, n) in enumerate(_B7_BASE_CFG):
        out_ch = _adjust_channels(co)
        nlayers = _adjust_depth(n)
        skeys = jax.random.split(jax.random.fold_in(keys[1], si), nlayers)
        for li in range(nlayers):
            stride = s if li == 0 else 1
            blocks.append(_mbconv_params(skeys[li], in_ch, out_ch, er, k, stride))
            in_ch = out_ch
    params["blocks"] = blocks

    head_out = 4 * in_ch  # 2560
    params["head_w"], params["head_b"] = _conv_bn_params(keys[2], head_out, in_ch, 1)

    # Classifier: Dropout (identity in eval), Linear(2560 -> 100), Linear(100 -> 2).
    params["fc1_w"] = jax.random.normal(keys[3], (head_out, 100), jnp.float32) * np.sqrt(1.0 / head_out)
    params["fc1_b"] = 0.01 * jax.random.normal(keys[4], (100,), jnp.float32)
    params["fc2_w"] = jax.random.normal(keys[5], (100, num_classes), jnp.float32) * np.sqrt(1.0 / 100.0)
    params["fc2_b"] = 0.01 * jax.random.normal(keys[6], (num_classes,), jnp.float32)
    return params


# --------------------------------------------------------------------------------------
# Forward pass
# --------------------------------------------------------------------------------------

def mbconv_forward(x, p):
    h = x
    if "exp_w" in p:
        h = conv1x1_bn(h, p["exp_w"], p["exp_b"], act="silu")
    h = depthwise_conv_bn_silu(h, p["dw_w"], p["dw_b"], k=p["k"], stride=p["stride"])
    h = squeeze_excite(h, p["se_w1"], p["se_b1"], p["se_w2"], p["se_b2"])
    if p["use_res"]:
        # TODO(synk): StochasticDepth is identity in eval mode.
        return conv1x1_bn_add(h, p["proj_w"], p["proj_b"], x)
    return conv1x1_bn(h, p["proj_w"], p["proj_b"], act="none")


def efficientnet_forward(params, x_nchw):
    # Input is NCHW (PyTorch convention), single channel; output logits (B, 2).
    x = jnp.transpose(x_nchw, (0, 2, 3, 1)).astype(jnp.float32)
    x = conv_bn(x, params["stem_w"], params["stem_b"], kh=3, kw=3, stride=2, pad=1, act="silu")
    for blk in params["blocks"]:
        x = mbconv_forward(x, blk)
    x = conv1x1_bn(x, params["head_w"], params["head_b"], act="silu")
    pooled = global_mean_pool(x)
    # Classifier: Dropout (eval identity) -> Linear(2560, 100) -> Linear(100, 2).
    h = linear(pooled, params["fc1_w"], params["fc1_b"])
    return linear(h, params["fc2_w"], params["fc2_b"])


# --------------------------------------------------------------------------------------

if __name__ == "__main__":
    key = jax.random.PRNGKey(0)
    kp, kx = jax.random.split(key)
    params = init_efficientnet_b7(kp, num_classes=2)
    # Single-channel input (the module replaces the first conv with in_channels=1).
    x = jax.random.normal(kx, (2, 1, 64, 64), jnp.float32)
    logits = efficientnet_forward(params, x)
    logits = jax.block_until_ready(logits)
    assert logits.shape == (2, 2), logits.shape
    assert bool(jnp.all(jnp.isfinite(logits)))
    print("KERNEL_OK")
</pallas_src>

<mosaic_0001>
module attributes {stable_mosaic.version = 11 : i64} {
  func.func @_gemm_kernel(%arg0: i32, %arg1: i32, %arg2: i32, %arg3: memref<256x16xbf16, #tpu.memory_space<vmem>>, %arg4: memref<16x128xbf16, #tpu.memory_space<vmem>>, %arg5: memref<1x128xf32, #tpu.memory_space<vmem>>, %arg6: memref<256x128xf32, #tpu.memory_space<vmem>>, %arg7: memref<256x128xf32, #tpu.memory_space<vmem>>) attributes {dimension_semantics = [#tpu.dimension_semantics<parallel>, #tpu.dimension_semantics<parallel>, #tpu.dimension_semantics<arbitrary>], iteration_bounds = array<i64: 8, 1, 1>, scalar_prefetch = 0 : i64, scratch_operands = 1 : i64, tpu.core_type = #tpu.core_type<tc>, window_params = [{transform_indices = @transform_0, window_bounds = array<i64: 256, 16>}, {transform_indices = @transform_1, window_bounds = array<i64: 16, 128>}, {transform_indices = @transform_2, window_bounds = array<i64: 1, 128>}, {transform_indices = @transform_3, window_bounds = array<i64: 256, 128>}]} {
    %c0_i32 = arith.constant 0 : i32
    %0 = arith.cmpi eq, %arg2, %c0_i32 : i32
    %1 = arith.extui %0 : i1 to i32
    %c0_i32_0 = arith.constant 0 : i32
    %2 = arith.cmpi ne, %1, %c0_i32_0 : i32
    scf.if %2 {
      %cst_10 = arith.constant 0.000000e+00 : f32
      %12 = vector.broadcast %cst_10 : f32 to vector<256x128xf32>
      %c0_11 = arith.constant 0 : index
      %c0_12 = arith.constant 0 : index
      %13 = vector.load %arg7[%c0_11, %c0_12] : memref<256x128xf32, #tpu.memory_space<vmem>>, vector<256x128xf32>
      tpu.vector_store %arg7[%c0_11, %c0_12], %12 {strides = array<i32>} : memref<256x128xf32, #tpu.memory_space<vmem>>, vector<256x128xf32>,
    } else {
    }
    %c0 = arith.constant 0 : index
    %c0_1 = arith.constant 0 : index
    %3 = vector.load %arg7[%c0, %c0_1] : memref<256x128xf32, #tpu.memory_space<vmem>>, vector<256x128xf32>
    %c0_2 = arith.constant 0 : index
    %c0_3 = arith.constant 0 : index
    %4 = vector.load %arg3[%c0_2, %c0_3] : memref<256x16xbf16, #tpu.memory_space<vmem>>, vector<256x16xbf16>
    %c0_4 = arith.constant 0 : index
    %c0_5 = arith.constant 0 : index
    %5 = vector.load %arg4[%c0_4, %c0_5] : memref<16x128xbf16, #tpu.memory_space<vmem>>, vector<16x128xbf16>
    %cst = arith.constant dense<0.000000e+00> : vector<256x128xf32>
    %6 = tpu.matmul %4, %5, %cst {dimension_numbers = #tpu.dot_dimension_numbers<[1], [0], [0], [1], [0, 0, 1, 1], [], []>} : vector<256x16xbf16>, vector<16x128xbf16>, vector<256x128xf32> -> vector<256x128xf32>
    %7 = arith.addf %3, %6 : vector<256x128xf32>
    %c0_6 = arith.constant 0 : index
    %c0_7 = arith.constant 0 : index
    %8 = vector.load %arg7[%c0_6, %c0_7] : memref<256x128xf32, #tpu.memory_space<vmem>>, vector<256x128xf32>
    tpu.vector_store %arg7[%c0_6, %c0_7], %7 {strides = array<i32>} : memref<256x128xf32, #tpu.memory_space<vmem>>, vector<256x128xf32>,
    %c0_i32_8 = arith.constant 0 : i32
    %9 = arith.cmpi eq, %arg2, %c0_i32_8 : i32
    %10 = arith.extui %9 : i1 to i32
    %c0_i32_9 = arith.constant 0 : i32
    %11 = arith.cmpi ne, %10, %c0_i32_9 : i32
    scf.if %11 {
      %c0_10 = arith.constant 0 : index
      %c0_11 = arith.constant 0 : index
      %12 = vector.load %arg7[%c0_10, %c0_11] : memref<256x128xf32, #tpu.memory_space<vmem>>, vector<256x128xf32>
      %c0_12 = arith.constant 0 : index
      %c0_13 = arith.constant 0 : index
      %13 = vector.load %arg5[%c0_12, %c0_13] : memref<1x128xf32, #tpu.memory_space<vmem>>, vector<1x128xf32>
      %14 = vector.broadcast %13 : vector<1x128xf32> to vector<256x128xf32>
      %15 = arith.addf %12, %14 : vector<256x128xf32>
      %cst_14 = arith.constant 0.000000e+00 : f32
      %16 = vector.broadcast %cst_14 : f32 to vector<256x128xf32>
      %17 = arith.subf %16, %15 : vector<256x128xf32>
      %18 = math.exp %17 : vector<256x128xf32>
      %cst_15 = arith.constant 1.000000e+00 : f32
      %19 = vector.broadcast %cst_15 : f32 to vector<256x128xf32>
      %20 = arith.addf %19, %18 : vector<256x128xf32>
      %cst_16 = arith.constant 1.000000e+00 : f32
      %21 = vector.broadcast %cst_16 : f32 to vector<256x128xf32>
      %22 = arith.divf %21, %20 : vector<256x128xf32>
      %23 = arith.mulf %15, %22 : vector<256x128xf32>
      %c0_17 = arith.constant 0 : index
      %c0_18 = arith.constant 0 : index
      %24 = vector.load %arg6[%c0_17, %c0_18] : memref<256x128xf32, #tpu.memory_space<vmem>>, vector<256x128xf32>
      tpu.vector_store %arg6[%c0_17, %c0_18], %23 {strides = array<i32>} : memref<256x128xf32, #tpu.memory_space<vmem>>, vector<256x128xf32>,
    } else {
    }
    return
  }
  func.func @transform_0(%arg0: i32, %arg1: i32, %arg2: i32) -> (i32, i32) {
    %c0_i32 = arith.constant 0 : i32
    return %arg0, %arg2 : i32, i32
  }
  func.func @transform_1(%arg0: i32, %arg1: i32, %arg2: i32) -> (i32, i32) {
    %c0_i32 = arith.constant 0 : i32
    return %arg2, %arg1 : i32, i32
  }
  func.func @transform_2(%arg0: i32, %arg1: i32, %arg2: i32) -> (i32, i32) {
    %c0_i32 = arith.constant 0 : i32
    %c0_i32_0 = arith.constant 0 : i32
    return %c0_i32, %arg1 : i32, i32
  }
  func.func @transform_3(%arg0: i32, %arg1: i32, %arg2: i32) -> (i32, i32) {
    %c0_i32 = arith.constant 0 : i32
    return %arg0, %arg1 : i32, i32
  }
}

</mosaic_0001>

<llo_original>
// kernel: conv_bn.1
$region0: #{conv_bn.1}
  #allocation0 [shape = 'u32[]', space=smem, size = 0x4, offset = 0x4, fixed_abs, tag = 'smem constant byte address 0x4 - core index']
  #allocation1 [shape = 'u32[144,128]{1,0:T(1,128)}', space=vmem, size = 0x12000, scoped, tag = 'internal scratch']
  #allocation2 [shape = 'f32[256,128]{1,0:T(8,128)}', space=vmem, size = 0x20000, scoped, tag = 'scratch operand']
  %s0 = inlined_call_operand.vmem [shape: bf16[2048,16], index: 0, kind: input, shape index: {}]
  %s1 = inlined_call_operand.vmem [shape: bf16[16,128], index: 1, kind: input, shape index: {}]
  %s2 = inlined_call_operand.vmem [shape: f32[1,128], index: 2, kind: input, shape index: {}]
  %s3 = inlined_call_operand.hbm [shape: f32[2048,128], index: 3, kind: output, shape index: {}]
  %s4 = sld [smem:[#allocation0]]
  $region53: #{conv_bn.1} parent=0
    _
  %s6 = ssub.s32 1, %s4
  %s7 = scalar_select 0, %s6, %s4
  $region1: #{conv_bn.1} parent=0
    #allocation3 [shape = 'u8[262144]{0}', space=vmem, size = 0x40000, scoped, tag = 'output window, operand 0']
    #allocation4 [shape = 's32[2]{0}', space=sflag, size = 0x8, scoped, tag = 'scoped memory for conv_bn.1']
    %8 = vsyncpa [#allocation4], 0
    %s9 = scalar_lea.sflag [#allocation4], 1
    %10 = vsyncpa %s9, 0
    loop: start=0, step=1, limit=10
    $region2: #{conv_bn.1} parent=1 // loop_pre_header
      _
    $region3: #{conv_bn.1} parent=1 // loop_header
      %s12 = sphi 0, %s16
      %p13 = scmp.ge.s32.totalorder %s12, 10
      %s19 = sphi 0, %s38
      %s20 = sphi 0, %s34
      %s21 = sphi 0, %s30
      %s22 = sphi 0, %s19
      %s23 = sphi 0, %s20
      %s24 = sphi 0, %s21
      %s25 = sphi 0, %s22
      %s26 = sphi 0, %s23
      %s27 = sphi 0, %s24
      %s43 = sphi 0, %s45
      %s46 = sphi 0, %s43
      %s47 = sphi 0, %s46
      %s63 = sphi 0, %s47
      %s71 = sphi 0, %s73
      %s74 = sphi 0, %s71
      %s75 = sphi 0, %s74
      %s91 = sphi 0, %s75
      %s97 = sphi 0, %s99
      %s100 = sphi 0, %s97
      %s101 = sphi 0, %s100
      %s117 = sphi 0, %s101
      %s125 = sphi 0, %s127
      %s128 = sphi 0, %s125
      %s129 = sphi 0, %s128
      %s145 = sphi 0, %s129
    $region4: #{conv_bn.1} parent=1 // loop_header_branch
      %15 = sbr.rel (%p13) target = $region8
    $region5: #{conv_bn.1} parent=1 // loop_body
      %s17 = ssub.s32 %s12, 1
      %s18 = ssub.s32 %s12, 2
      %s28 = sadd.s32 1, %s21
      %p29 = scmp.ge.s32.totalorder %s28, 1
      %s30 = scalar_select %p29, 0, %s28
      %s31 = sadd.s32 1, %s20
      %s32 = scalar_select %p29, %s31, %s20
      %p33 = scmp.ge.s32.totalorder %s32, 1
      %s34 = scalar_select %p33, 0, %s32
      %s35 = sadd.s32 1, %s19
      %s36 = scalar_select %p33, %s35, %s19
      %p37 = scmp.ge.s32.totalorder %s36, 8
      %s38 = scalar_select %p37, 0, %s36
      %s39 = ssub.s32 %s19, %s38
      %s40 = ssub.s32 %s21, %s30
      %s41 = sor.u32 %s39, %s40
      %p42 = scmp.eq.s32.totalorder %s41, 0
      %s44 = sadd.s32 %s43, 1
      %s45 = scalar_select %p42, %s43, %s44
      %p48 = pneg %p42
      %p49 = scmp.eq.s32.totalorder %s12, 7
      %p50 = por %p48, %p49
      %p51 = scmp.ne.s32.totalorder %s43, %s46
      %p52 = scmp.eq.s32.totalorder %s12, 0
      %p53 = por %p51, %p52
      %p54 = scmp.ne.s32.totalorder %s43, %s46
      %p55 = scmp.eq.s32.totalorder %s17, 7
      %p56 = por %p54, %p55
      %p57 = scmp.ne.s32.totalorder %s46, %s47
      %p58 = scmp.eq.s32.totalorder %s17, 0
      %p59 = por %p57, %p58
      %p60 = scmp.ne.s32.totalorder %s46, %s47
      %p61 = scmp.eq.s32.totalorder %s18, 7
      %p62 = por %p60, %p61
      %p64 = scmp.ne.s32.totalorder %s47, %s63
      %p65 = scmp.eq.s32.totalorder %s18, 0
      %p66 = por %p64, %p65
      %s67 = ssub.s32 %s21, %s30
      %s68 = ssub.s32 %s20, %s34
      %s69 = sor.u32 %s67, %s68
      %p70 = scmp.eq.s32.totalorder %s69, 0
      %s72 = sadd.s32 %s71, 1
      %s73 = scalar_select %p70, %s71, %s72
      %p76 = pneg %p70
      %p77 = scmp.eq.s32.totalorder %s12, 7
      %p78 = por %p76, %p77
      %p79 = scmp.ne.s32.totalorder %s71, %s74
      %p80 = scmp.eq.s32.totalorder %s12, 0
      %p81 = por %p79, %p80
      %p82 = scmp.ne.s32.totalorder %s71, %s74
      %p83 = scmp.eq.s32.totalorder %s17, 7
      %p84 = por %p82, %p83
      %p85 = scmp.ne.s32.totalorder %s74, %s75
      %p86 = scmp.eq.s32.totalorder %s17, 0
      %p87 = por %p85, %p86
      %p88 = scmp.ne.s32.totalorder %s74, %s75
      %p89 = scmp.eq.s32.totalorder %s18, 7
      %p90 = por %p88, %p89
      %p92 = scmp.ne.s32.totalorder %s75, %s91
      %p93 = scmp.eq.s32.totalorder %s18, 0
      %p94 = por %p92, %p93
      %s95 = ssub.s32 %s20, %s34
      %p96 = scmp.eq.s32.totalorder %s95, 0
      %s98 = sadd.s32 %s97, 1
      %s99 = scalar_select %p96, %s97, %s98
      %p102 = pneg %p96
      %p103 = scmp.eq.s32.totalorder %s12, 7
      %p104 = por %p102, %p103
      %p105 = scmp.ne.s32.totalorder %s97, %s100
      %p106 = scmp.eq.s32.totalorder %s12, 0
      %p107 = por %p105, %p106
      %p108 = scmp.ne.s32.totalorder %s97, %s100
      %p109 = scmp.eq.s32.totalorder %s17, 7
      %p110 = por %p108, %p109
      %p111 = scmp.ne.s32.totalorder %s100, %s101
      %p112 = scmp.eq.s32.totalorder %s17, 0
      %p113 = por %p111, %p112
      %p114 = scmp.ne.s32.totalorder %s100, %s101
      %p115 = scmp.eq.s32.totalorder %s18, 7
      %p116 = por %p114, %p115
      %p118 = scmp.ne.s32.totalorder %s101, %s117
      %p119 = scmp.eq.s32.totalorder %s18, 0
      %p120 = por %p118, %p119
      %s121 = ssub.s32 %s19, %s38
      %s122 = ssub.s32 %s20, %s34
      %s123 = sor.u32 %s121, %s122
      %p124 = scmp.eq.s32.totalorder %s123, 0
      %s126 = sadd.s32 %s125, 1
      %s127 = scalar_select %p124, %s125, %s126
      %p130 = pneg %p124
      %p131 = scmp.eq.s32.totalorder %s12, 7
      %p132 = por %p130, %p131
      %p133 = scmp.ne.s32.totalorder %s125, %s128
      %p134 = scmp.eq.s32.totalorder %s12, 0
      %p135 = por %p133, %p134
      %p136 = scmp.ne.s32.totalorder %s125, %s128
      %p137 = scmp.eq.s32.totalorder %s17, 7
      %p138 = por %p136, %p137
      %p139 = scmp.ne.s32.totalorder %s128, %s129
      %p140 = scmp.eq.s32.totalorder %s17, 0
      %p141 = por %p139, %p140
      %p142 = scmp.ne.s32.totalorder %s128, %s129
      %p143 = scmp.eq.s32.totalorder %s18, 7
      %p144 = por %p142, %p143
      %p146 = scmp.ne.s32.totalorder %s129, %s145
      %p147 = scmp.eq.s32.totalorder %s18, 0
      %p148 = por %p146, %p147
      %p149 = scmp.le.s32.totalorder 1, %s12
      %p150 = scmp.lt.s32.totalorder %s12, 9
      %p151 = pnand %p149, %p150
      %p152 = pneg %p151
      // Predicated region
      $region9: #{conv_bn.1} parent=5 // pred_check
        _
      $region10: #{conv_bn.1} parent=5 // pred_check_branch
        %154 = sbr.rel (%p151) target = $region12
      $region11: #{conv_bn.1} parent=5 // pred_region
        %s155 = ssub.s32 %s12, 1
        // Predicated region
        $region13: #{conv_bn.1} parent=11 // pred_check
          %p156 = pneg %p87
        $region14: #{conv_bn.1} parent=11 // pred_check_branch
          %158 = sbr.rel (%p156) target = $region16
        $region15: #{conv_bn.1} parent=11 // pred_region
          %s159 = smul.u32 2, %s24
          %p160 = scmp.lt.s32.totalorder %s159, 1
          %s161 = scalar_select %p160, %s159, 1
          %p162 = scmp.lt.s32.totalorder %s23, 0
          %s163 = scalar_select %p162, %s23, 0
          %s164 = sadd.s32 %s163, %s161
          %s165 = smul.addr %s164, 4
          %s166 = scalar_lea.vmem %s1, %s165
          %s167 = smul.u32 2, %s24
        $region16: #{conv_bn.1} parent=11 // pred_fallthru
          _
        // Predicated region
        $region17: #{conv_bn.1} parent=11 // pred_check
          %p168 = pneg %p113
        $region18: #{conv_bn.1} parent=11 // pred_check_branch
          %170 = sbr.rel (%p168) target = $region20
        $region19: #{conv_bn.1} parent=11 // pred_region
          %p171 = scmp.lt.s32.totalorder %s23, 0
          %s172 = scalar_select %p171, %s23, 0
          %s173 = scalar_lea.vmem %s2, %s172
        $region20: #{conv_bn.1} parent=11 // pred_fallthru
          _
      $region12: #{conv_bn.1} parent=5 // pred_fallthru
        _
      %p174 = scmp.lt.s32.totalorder %s12, 8
      // Predicated region
      $region21: #{conv_bn.1} parent=5 // pred_check
        %p175 = pneg %p174
      $region22: #{conv_bn.1} parent=5 // pred_check_branch
        %177 = sbr.rel (%p175) target = $region24
      $region23: #{conv_bn.1} parent=5 // pred_region
        // Predicated region
        $region25: #{conv_bn.1} parent=23 // pred_check
          %p178 = pneg %p53
        $region26: #{conv_bn.1} parent=23 // pred_check_branch
          %180 = sbr.rel (%p178) target = $region28
        $region27: #{conv_bn.1} parent=23 // pred_region
          %s181 = smul.u32 32, %s19
          %p182 = scmp.lt.s32.totalorder %s181, 255
          %s183 = scalar_select %p182, %s181, 255
          %p184 = scmp.lt.s32.totalorder %s21, 0
          %s185 = scalar_select %p184, %s21, 0
          %s186 = sadd.s32 %s185, %s183
          %s187 = smul.addr %s186, 4
          %s188 = scalar_lea.vmem %s0, %s187
          %s189 = smul.u32 32, %s19
        $region28: #{conv_bn.1} parent=23 // pred_fallthru
          _
      $region24: #{conv_bn.1} parent=5 // pred_fallthru
        _
      %p190 = scmp.le.s32.totalorder 1, %s12
      %p191 = scmp.lt.s32.totalorder %s12, 9
      %p192 = pnand %p190, %p191
      %p193 = pneg %p192
      // Predicated region
      $region29: #{conv_bn.1} parent=5 // pred_check
        _
      $region30: #{conv_bn.1} parent=5 // pred_check_branch
        %195 = sbr.rel (%p192) target = $region32
      $region31: #{conv_bn.1} parent=5 // pred_region
        %s196 = ssub.s32 %s12, 1
        %s197 = smul.u32 32, %s22
        %p198 = scmp.lt.s32.totalorder %s197, 255
        %s199 = scalar_select %p198, %s197, 255
        %p200 = scmp.lt.s32.totalorder %s24, 0
        %s201 = scalar_select %p200, %s24, 0
        %s202 = sadd.s32 %s201, %s199
        %s203 = smul.addr %s202, 4
        %s204 = scalar_lea.vmem %s0, %s203
        %p205 = pneg %p59
        %p206 = pneg %p56
        %s207 = smul.u32 2, %s24
        %p208 = scmp.lt.s32.totalorder %s207, 1
        %s209 = scalar_select %p208, %s207, 1
        %p210 = scmp.lt.s32.totalorder %s23, 0
        %s211 = scalar_select %p210, %s23, 0
        %s212 = sadd.s32 %s211, %s209
        %s213 = smul.addr %s212, 4
        %s214 = scalar_lea.vmem %s1, %s213
        %p215 = pneg %p87
        %p216 = pneg %p84
        %p217 = scmp.lt.s32.totalorder %s23, 0
        %s218 = scalar_select %p217, %s23, 0
        %s219 = scalar_lea.vmem %s2, %s218
        %p220 = pneg %p113
        %p221 = pneg %p110
        %p222 = pneg %p141
        %p223 = pneg %p138
        %s224 = sand.u32 %s128, 1
        %s225 = scalar_lea.sflag [#allocation4], %s224
        %s226 = sand.u32 %s128, 1
        %s227 = smul.addr %s226, 256
        %s228 = scalar_lea.vmem [#allocation3], %s227
        %s229 = smul.u32 32, %s22
        %p230 = scmp.lt.s32.totalorder %s229, 255
        %s231 = scalar_select %p230, %s229, 255
        %p232 = scmp.lt.s32.totalorder %s24, 0
        %s233 = scalar_select %p232, %s24, 0
        %s234 = sadd.s32 %s233, %s231
        %s235 = smul.addr %s234, 4
        %s236 = scalar_lea.vmem %s0, %s235
        %s237 = smul.u32 32, %s22
        %s238 = smul.u32 2, %s24
        %p239 = scmp.lt.s32.totalorder %s238, 1
        %s240 = scalar_select %p239, %s238, 1
        %p241 = scmp.lt.s32.totalorder %s23, 0
        %s242 = scalar_select %p241, %s23, 0
        %s243 = sadd.s32 %s242, %s240
        %s244 = smul.addr %s243, 4
        %s245 = scalar_lea.vmem %s1, %s244
        %s246 = smul.u32 2, %s24
        %p247 = scmp.lt.s32.totalorder %s23, 0
        %s248 = scalar_select %p247, %s23, 0
        %s249 = scalar_lea.vmem %s2, %s248
        %s250 = smul.u32 32, %s22
        %p252 = scmp.eq.s32.totalorder %s24, 0
        // Predicated region
        $region33: #{conv_bn.1} parent=31 // pred_check
          %p253 = pneg %p252
        $region34: #{conv_bn.1} parent=31 // pred_check_branch
          %255 = sbr.rel (%p253) target = $region36
        $region35: #{conv_bn.1} parent=31 // pred_region
          %256 = vst [vmem:[#allocation2] sm:$0xff] 0.0
          %257 = vst [vmem:[#allocation2 + $0x8] sm:$0xff] 0.0
          %258 = vst [vmem:[#allocation2 + $0x10] sm:$0xff] 0.0
          %259 = vst [vmem:[#allocation2 + $0x18] sm:$0xff] 0.0
          %260 = vst [vmem:[#allocation2 + $0x20] sm:$0xff] 0.0
          %261 = vst [vmem:[#allocation2 + $0x28] sm:$0xff] 0.0
          %262 = vst [vmem:[#allocation2 + $0x30] sm:$0xff] 0.0
          %263 = vst [vmem:[#allocation2 + $0x38] sm:$0xff] 0.0
          %264 = vst [vmem:[#allocation2 + $0x40] sm:$0xff] 0.0
          %265 = vst [vmem:[#allocation2 + $0x48] sm:$0xff] 0.0
          %266 = vst [vmem:[#allocation2 + $0x50] sm:$0xff] 0.0
          %267 = vst [vmem:[#allocation2 + $0x58] sm:$0xff] 0.0
          %268 = vst [vmem:[#allocation2 + $0x60] sm:$0xff] 0.0
          %269 = vst [vmem:[#allocation2 + $0x68] sm:$0xff] 0.0
          %270 = vst [vmem:[#allocation2 + $0x70] sm:$0xff] 0.0
          %271 = vst [vmem:[#allocation2 + $0x78] sm:$0xff] 0.0
          %272 = vst [vmem:[#allocation2 + $0x80] sm:$0xff] 0.0
          %273 = vst [vmem:[#allocation2 + $0x88] sm:$0xff] 0.0
          %274 = vst [vmem:[#allocation2 + $0x90] sm:$0xff] 0.0
          %275 = vst [vmem:[#allocation2 + $0x98] sm:$0xff] 0.0
          %276 = vst [vmem:[#allocation2 + $0xa0] sm:$0xff] 0.0
          %277 = vst [vmem:[#allocation2 + $0xa8] sm:$0xff] 0.0
          %278 = vst [vmem:[#allocation2 + $0xb0] sm:$0xff] 0.0
          %279 = vst [vmem:[#allocation2 + $0xb8] sm:$0xff] 0.0
          %280 = vst [vmem:[#allocation2 + $0xc0] sm:$0xff] 0.0
          %281 = vst [vmem:[#allocation2 + $0xc8] sm:$0xff] 0.0
          %282 = vst [vmem:[#allocation2 + $0xd0] sm:$0xff] 0.0
          %283 = vst [vmem:[#allocation2 + $0xd8] sm:$0xff] 0.0
          %284 = vst [vmem:[#allocation2 + $0xe0] sm:$0xff] 0.0
          %285 = vst [vmem:[#allocation2 + $0xe8] sm:$0xff] 0.0
          %286 = vst [vmem:[#allocation2 + $0xf0] sm:$0xff] 0.0
          %287 = vst [vmem:[#allocation2 + $0xf8] sm:$0xff] 0.0
        $region36: #{conv_bn.1} parent=31 // pred_fallthru
          _
        %v288 = vld [vmem:[#allocation2] sm:$0xff]
        %v289 = vld [vmem:[#allocation2 + $0x8] sm:$0xff]
        %v290 = vld [vmem:[#allocation2 + $0x10] sm:$0xff]
        %v291 = vld [vmem:[#allocation2 + $0x18] sm:$0xff]
        %v292 = vld [vmem:[#allocation2 + $0x20] sm:$0xff]
        %v293 = vld [vmem:[#allocation2 + $0x28] sm:$0xff]
        %v294 = vld [vmem:[#allocation2 + $0x30] sm:$0xff]
        %v295 = vld [vmem:[#allocation2 + $0x38] sm:$0xff]
        %v296 = vld [vmem:[#allocation2 + $0x40] sm:$0xff]
        %v297 = vld [vmem:[#allocation2 + $0x48] sm:$0xff]
        %v298 = vld [vmem:[#allocation2 + $0x50] sm:$0xff]
        %v299 = vld [vmem:[#allocation2 + $0x58] sm:$0xff]
        %v300 = vld [vmem:[#allocation2 + $0x60] sm:$0xff]
        %v301 = vld [vmem:[#allocation2 + $0x68] sm:$0xff]
        %v302 = vld [vmem:[#allocation2 + $0x70] sm:$0xff]
        %v303 = vld [vmem:[#allocation2 + $0x78] sm:$0xff]
        %v304 = vld [vmem:[#allocation2 + $0x80] sm:$0xff]
        %v305 = vld [vmem:[#allocation2 + $0x88] sm:$0xff]
        %v306 = vld [vmem:[#allocation2 + $0x90] sm:$0xff]
        %v307 = vld [vmem:[#allocation2 + $0x98] sm:$0xff]
        %v308 = vld [vmem:[#allocation2 + $0xa0] sm:$0xff]
        %v309 = vld [vmem:[#allocation2 + $0xa8] sm:$0xff]
        %v310 = vld [vmem:[#allocation2 + $0xb0] sm:$0xff]
        %v311 = vld [vmem:[#allocation2 + $0xb8] sm:$0xff]
        %v312 = vld [vmem:[#allocation2 + $0xc0] sm:$0xff]
        %v313 = vld [vmem:[#allocation2 + $0xc8] sm:$0xff]
        %v314 = vld [vmem:[#allocation2 + $0xd0] sm:$0xff]
        %v315 = vld [vmem:[#allocation2 + $0xd8] sm:$0xff]
        %v316 = vld [vmem:[#allocation2 + $0xe0] sm:$0xff]
        %v317 = vld [vmem:[#allocation2 + $0xe8] sm:$0xff]
        %v318 = vld [vmem:[#allocation2 + $0xf0] sm:$0xff]
        %v319 = vld [vmem:[#allocation2 + $0xf8] sm:$0xff]
        %v320 = vld [vmem:[%s236] sm:$0xf]
        %v321 = vld [vmem:[%s236 + $0x4] sm:$0xf]
        %v322 = vld [vmem:[%s236 + $0x8] sm:$0xf]
        %v323 = vld [vmem:[%s236 + $0xc] sm:$0xf]
        %v324 = vld [vmem:[%s236 + $0x10] sm:$0xf]
        %v325 = vld [vmem:[%s236 + $0x14] sm:$0xf]
        %v326 = vld [vmem:[%s236 + $0x18] sm:$0xf]
        %v327 = vld [vmem:[%s236 + $0x1c] sm:$0xf]
        %v328 = vld [vmem:[%s236 + $0x20] sm:$0xf]
        %v329 = vld [vmem:[%s236 + $0x24] sm:$0xf]
        %v330 = vld [vmem:[%s236 + $0x28] sm:$0xf]
        %v331 = vld [vmem:[%s236 + $0x2c] sm:$0xf]
        %v332 = vld [vmem:[%s236 + $0x30] sm:$0xf]
        %v333 = vld [vmem:[%s236 + $0x34] sm:$0xf]
        %v334 = vld [vmem:[%s236 + $0x38] sm:$0xf]
        %v335 = vld [vmem:[%s236 + $0x3c] sm:$0xf]
        %v336 = vld [vmem:[%s236 + $0x40] sm:$0xf]
        %v337 = vld [vmem:[%s236 + $0x44] sm:$0xf]
        %v338 = vld [vmem:[%s236 + $0x48] sm:$0xf]
        %v339 = vld [vmem:[%s236 + $0x4c] sm:$0xf]
        %v340 = vld [vmem:[%s236 + $0x50] sm:$0xf]
        %v341 = vld [vmem:[%s236 + $0x54] sm:$0xf]
        %v342 = vld [vmem:[%s236 + $0x58] sm:$0xf]
        %v343 = vld [vmem:[%s236 + $0x5c] sm:$0xf]
        %v344 = vld [vmem:[%s236 + $0x60] sm:$0xf]
        %v345 = vld [vmem:[%s236 + $0x64] sm:$0xf]
        %v346 = vld [vmem:[%s236 + $0x68] sm:$0xf]
        %v347 = vld [vmem:[%s236 + $0x6c] sm:$0xf]
        %v348 = vld [vmem:[%s236 + $0x70] sm:$0xf]
        %v349 = vld [vmem:[%s236 + $0x74] sm:$0xf]
        %v350 = vld [vmem:[%s236 + $0x78] sm:$0xf]
        %v351 = vld [vmem:[%s236 + $0x7c] sm:$0xf]
        %v352 = vld [vmem:[%s245] sm:$0xf]
        %v353 = vld [vmem:[%s245 + $0x4] sm:$0xf]
        %v386 = vunpack.c.l.b16 %v320
        %v387 = vunpack.c.l.b16 %v321
        %v388 = vunpack.c.l.b16 %v322
        %v389 = vunpack.c.l.b16 %v323
        %v390 = vunpack.c.l.b16 %v324
        %v391 = vunpack.c.l.b16 %v325
        %v392 = vunpack.c.l.b16 %v326
        %v393 = vunpack.c.l.b16 %v327
        %v394 = vunpack.c.l.b16 %v328
        %v395 = vunpack.c.l.b16 %v329
        %v396 = vunpack.c.l.b16 %v330
        %v397 = vunpack.c.l.b16 %v331
        %v398 = vunpack.c.l.b16 %v332
        %v399 = vunpack.c.l.b16 %v333
        %v400 = vunpack.c.l.b16 %v334
        %v401 = vunpack.c.l.b16 %v335
        %v402 = vunpack.c.l.b16 %v336
        %v403 = vunpack.c.l.b16 %v337
        %v404 = vunpack.c.l.b16 %v338
        %v405 = vunpack.c.l.b16 %v339
        %v406 = vunpack.c.l.b16 %v340
        %v407 = vunpack.c.l.b16 %v341
        %v408 = vunpack.c.l.b16 %v342
        %v409 = vunpack.c.l.b16 %v343
        %v410 = vunpack.c.l.b16 %v344
        %v411 = vunpack.c.l.b16 %v345
        %v412 = vunpack.c.l.b16 %v346
        %v413 = vunpack.c.l.b16 %v347
        %v414 = vunpack.c.l.b16 %v348
        %v415 = vunpack.c.l.b16 %v349
        %v416 = vunpack.c.l.b16 %v350
        %v417 = vunpack.c.l.b16 %v351
        %v418 = vpack.c.b16 %v387, %v386
        %v419 = vpack.c.b16 %v389, %v388
        %v420 = vpack.c.b16 %v391, %v390
        %v421 = vpack.c.b16 %v393, %v392
        %v422 = vpack.c.b16 %v395, %v394
        %v423 = vpack.c.b16 %v397, %v396
        %v424 = vpack.c.b16 %v399, %v398
        %v425 = vpack.c.b16 %v401, %v400
        %v426 = vpack.c.b16 %v403, %v402
        %v427 = vpack.c.b16 %v405, %v404
        %v428 = vpack.c.b16 %v407, %v406
        %v429 = vpack.c.b16 %v409, %v408
        %v430 = vpack.c.b16 %v411, %v410
        %v431 = vpack.c.b16 %v413, %v412
        %v432 = vpack.c.b16 %v415, %v414
        %v433 = vpack.c.b16 %v417, %v416
        %v436 = vunpack.c.l.b16 %v352
        %v437 = vunpack.c.l.b16 %v353
        %v438 = vpack.c.b16 %v437, %v436
        %vm440 = vcmask 130048
        %v442 = vsel %vm440, %v418, 0
        %v445 = vsel %vm440, %v419, 0
        %v448 = vsel %vm440, %v420, 0
        %v451 = vsel %vm440, %v421, 0
        %v454 = vsel %vm440, %v422, 0
        %v457 = vsel %vm440, %v423, 0
        %v460 = vsel %vm440, %v424, 0
        %v463 = vsel %vm440, %v425, 0
        %v466 = vsel %vm440, %v426, 0
        %v469 = vsel %vm440, %v427, 0
        %v472 = vsel %vm440, %v428, 0
        %v475 = vsel %vm440, %v429, 0
        %v478 = vsel %vm440, %v430, 0
        %v481 = vsel %vm440, %v431, 0
        %v484 = vsel %vm440, %v432, 0
        %v487 = vsel %vm440, %v433, 0
        %489 = vmatprep.subr.bf16.mxu0 0
        %490 = vmatpush1.bf16.msra.mxu0 %v438
        %491 = vmatprep.subr.bf16.mxu0 0
        %492 = vmatpush1.bf16.msra.mxu0 0
        %493 = vmatprep.subr.bf16.mxu0 0
        %494 = vmatpush1.bf16.msra.mxu0 0
        %495 = vmatprep.subr.bf16.mxu0 0
        %496 = vmatpush1.bf16.msra.mxu0 0
        %497 = vmatprep.subr.bf16.mxu0 0
        %498 = vmatpush1.bf16.msra.mxu0 0
        %499 = vmatprep.subr.bf16.mxu0 0
        %500 = vmatpush1.bf16.msra.mxu0 0
        %501 = vmatprep.subr.bf16.mxu0 0
        %502 = vmatpush1.bf16.msra.mxu0 0
        %503 = vmatprep.subr.bf16.mxu0 0
        %504 = vmatpush1.bf16.msra.mxu0 0
        %505 = vmatprep.subr.bf16.mxu0 0
        %506 = vmatpush1.bf16.msra.mxu0 0
        %507 = vmatprep.subr.bf16.mxu0 0
        %508 = vmatpush1.bf16.msra.mxu0 0
        %509 = vmatprep.subr.bf16.mxu0 0
        %510 = vmatpush1.bf16.msra.mxu0 0
        %511 = vmatprep.subr.bf16.mxu0 0
        %512 = vmatpush1.bf16.msra.mxu0 0
        %513 = vmatprep.subr.bf16.mxu0 0
        %514 = vmatpush1.bf16.msra.mxu0 0
        %515 = vmatprep.subr.bf16.mxu0 0
        %516 = vmatpush1.bf16.msra.mxu0 0
        %517 = vmatprep.subr.bf16.mxu0 0
        %518 = vmatpush1.bf16.msra.mxu0 0
        %519 = vmatprep.subr.bf16.mxu0 0
        %520 = vmatpush1.bf16.msra.mxu0 0
        %521 = vmatprep.mubr.bf16.mxu0 0
        %522 = vmatmul.mubr.bf16.gmra.mrb[0].mxu0 %v442
        %v523 = vpop.f32.mrb[0].mxu0
        %v524 = vadd.f32 0.0, %v523
        %v525 = vpop.f32.mrb[0].mxu0
        %v526 = vpop.f32.mrb[0].mxu0
        %v527 = vadd.f32 0.0, %v526
        %v528 = vpop.f32.mrb[0].mxu0
        %529 = vmatprep.mubr.bf16.mxu0 0
        %530 = vmatmul.mubr.bf16.gmra.mrb[0].mxu0 %v445
        %v531 = vpop.f32.mrb[0].mxu0
        %v532 = vadd.f32 0.0, %v531
        %v533 = vpop.f32.mrb[0].mxu0
        %v534 = vpop.f32.mrb[0].mxu0
        %v535 = vadd.f32 0.0, %v534
        %v536 = vpop.f32.mrb[0].mxu0
        %537 = vmatprep.mubr.bf16.mxu0 0
        %538 = vmatmul.mubr.bf16.gmra.mrb[0].mxu0 %v448
        %v539 = vpop.f32.mrb[0].mxu0
        %v540 = vadd.f32 0.0, %v539
        %v541 = vpop.f32.mrb[0].mxu0
        %v542 = vpop.f32.mrb[0].mxu0
        %v543 = vadd.f32 0.0, %v542
        %v544 = vpop.f32.mrb[0].mxu0
        %545 = vmatprep.mubr.bf16.mxu0 0
        %546 = vmatmul.mubr.bf16.gmra.mrb[0].mxu0 %v451
        %v547 = vpop.f32.mrb[0].mxu0
        %v548 = vadd.f32 0.0, %v547
        %v549 = vpop.f32.mrb[0].mxu0
        %v550 = vpop.f32.mrb[0].mxu0
        %v551 = vadd.f32 0.0, %v550
        %v552 = vpop.f32.mrb[0].mxu0
        %553 = vmatprep.mubr.bf16.mxu0 0
        %554 = vmatmul.mubr.bf16.gmra.mrb[0].mxu0 %v454
        %v555 = vpop.f32.mrb[0].mxu0
        %v556 = vadd.f32 0.0, %v555
        %v557 = vpop.f32.mrb[0].mxu0
        %v558 = vpop.f32.mrb[0].mxu0
        %v559 = vadd.f32 0.0, %v558
        %v560 = vpop.f32.mrb[0].mxu0
        %561 = vmatprep.mubr.bf16.mxu0 0
        %562 = vmatmul.mubr.bf16.gmra.mrb[0].mxu0 %v457
        %v563 = vpop.f32.mrb[0].mxu0
        %v564 = vadd.f32 0.0, %v563
        %v565 = vpop.f32.mrb[0].mxu0
        %v566 = vpop.f32.mrb[0].mxu0
        %v567 = vadd.f32 0.0, %v566
        %v568 = vpop.f32.mrb[0].mxu0
        %569 = vmatprep.mubr.bf16.mxu0 0
        %570 = vmatmul.mubr.bf16.gmra.mrb[0].mxu0 %v460
        %v571 = vpop.f32.mrb[0].mxu0
        %v572 = vadd.f32 0.0, %v571
        %v573 = vpop.f32.mrb[0].mxu0
        %v574 = vpop.f32.mrb[0].mxu0
        %v575 = vadd.f32 0.0, %v574
        %v576 = vpop.f32.mrb[0].mxu0
        %577 = vmatprep.mubr.bf16.mxu0 0
        %578 = vmatmul.mubr.bf16.gmra.mrb[0].mxu0 %v463
        %v579 = vpop.f32.mrb[0].mxu0
        %v580 = vadd.f32 0.0, %v579
        %v581 = vpop.f32.mrb[0].mxu0
        %v582 = vpop.f32.mrb[0].mxu0
        %v583 = vadd.f32 0.0, %v582
        %v584 = vpop.f32.mrb[0].mxu0
        %585 = vmatprep.mubr.bf16.mxu0 0
        %586 = vmatmul.mubr.bf16.gmra.mrb[0].mxu0 %v466
        %v587 = vpop.f32.mrb[0].mxu0
        %v588 = vadd.f32 0.0, %v587
        %v589 = vpop.f32.mrb[0].mxu0
        %v590 = vpop.f32.mrb[0].mxu0
        %v591 = vadd.f32 0.0, %v590
        %v592 = vpop.f32.mrb[0].mxu0
        %593 = vmatprep.mubr.bf16.mxu0 0
        %594 = vmatmul.mubr.bf16.gmra.mrb[0].mxu0 %v469
        %v595 = vpop.f32.mrb[0].mxu0
        %v596 = vadd.f32 0.0, %v595
        %v597 = vpop.f32.mrb[0].mxu0
        %v598 = vpop.f32.mrb[0].mxu0
        %v599 = vadd.f32 0.0, %v598
        %v600 = vpop.f32.mrb[0].mxu0
        %601 = vmatprep.mubr.bf16.mxu0 0
        %602 = vmatmul.mubr.bf16.gmra.mrb[0].mxu0 %v472
        %v603 = vpop.f32.mrb[0].mxu0
        %v604 = vadd.f32 0.0, %v603
        %v605 = vpop.f32.mrb[0].mxu0
        %v606 = vpop.f32.mrb[0].mxu0
        %v607 = vadd.f32 0.0, %v606
        %v608 = vpop.f32.mrb[0].mxu0
        %609 = vmatprep.mubr.bf16.mxu0 0
        %610 = vmatmul.mubr.bf16.gmra.mrb[0].mxu0 %v475
        %v611 = vpop.f32.mrb[0].mxu0
        %v612 = vadd.f32 0.0, %v611
        %v613 = vpop.f32.mrb[0].mxu0
        %v614 = vpop.f32.mrb[0].mxu0
        %v615 = vadd.f32 0.0, %v614
        %v616 = vpop.f32.mrb[0].mxu0
        %617 = vmatprep.mubr.bf16.mxu0 0
        %618 = vmatmul.mubr.bf16.gmra.mrb[0].mxu0 %v478
        %v619 = vpop.f32.mrb[0].mxu0
        %v620 = vadd.f32 0.0, %v619
        %v621 = vpop.f32.mrb[0].mxu0
        %v622 = vpop.f32.mrb[0].mxu0
        %v623 = vadd.f32 0.0, %v622
        %v624 = vpop.f32.mrb[0].mxu0
        %625 = vmatprep.mubr.bf16.mxu0 0
        %626 = vmatmul.mubr.bf16.gmra.mrb[0].mxu0 %v481
        %v627 = vpop.f32.mrb[0].mxu0
        %v628 = vadd.f32 0.0, %v627
        %v629 = vpop.f32.mrb[0].mxu0
        %v630 = vpop.f32.mrb[0].mxu0
        %v631 = vadd.f32 0.0, %v630
        %v632 = vpop.f32.mrb[0].mxu0
        %633 = vmatprep.mubr.bf16.mxu0 0
        %634 = vmatmul.mubr.bf16.gmra.mrb[0].mxu0 %v484
        %v635 = vpop.f32.mrb[0].mxu0
        %v636 = vadd.f32 0.0, %v635
        %v637 = vpop.f32.mrb[0].mxu0
        %v638 = vpop.f32.mrb[0].mxu0
        %v639 = vadd.f32 0.0, %v638
        %v640 = vpop.f32.mrb[0].mxu0
        %641 = vmatprep.mubr.bf16.mxu0 0
        %642 = vmatmul.mubr.bf16.gmra.mrb[0].mxu0 %v487
        %v643 = vpop.f32.mrb[0].mxu0
        %v644 = vadd.f32 0.0, %v643
        %v645 = vpop.f32.mrb[0].mxu0
        %v646 = vpop.f32.mrb[0].mxu0
        %v647 = vadd.f32 0.0, %v646
        %v648 = vpop.f32.mrb[0].mxu0
        %649 = vdwg.mxu0
        %v650 = vadd.f32 %v288, %v524
        %v651 = vadd.f32 %v289, %v527
        %v652 = vadd.f32 %v290, %v532
        %v653 = vadd.f32 %v291, %v535
        %v654 = vadd.f32 %v292, %v540
        %v655 = vadd.f32 %v293, %v543
        %v656 = vadd.f32 %v294, %v548
        %v657 = vadd.f32 %v295, %v551
        %v658 = vadd.f32 %v296, %v556
        %v659 = vadd.f32 %v297, %v559
        %v660 = vadd.f32 %v298, %v564
        %v661 = vadd.f32 %v299, %v567
        %v662 = vadd.f32 %v300, %v572
        %v663 = vadd.f32 %v301, %v575
        %v664 = vadd.f32 %v302, %v580
        %v665 = vadd.f32 %v303, %v583
        %v666 = vadd.f32 %v304, %v588
        %v667 = vadd.f32 %v305, %v591
        %v668 = vadd.f32 %v306, %v596
        %v669 = vadd.f32 %v307, %v599
        %v670 = vadd.f32 %v308, %v604
        %v671 = vadd.f32 %v309, %v607
        %v672 = vadd.f32 %v310, %v612
        %v673 = vadd.f32 %v311, %v615
        %v674 = vadd.f32 %v312, %v620
        %v675 = vadd.f32 %v313, %v623
        %v676 = vadd.f32 %v314, %v628
        %v677 = vadd.f32 %v315, %v631
        %v678 = vadd.f32 %v316, %v636
        %v679 = vadd.f32 %v317, %v639
        %v680 = vadd.f32 %v318, %v644
        %v681 = vadd.f32 %v319, %v647
        %682 = vst [vmem:[#allocation2] sm:$0xff] %v650
        %683 = vst [vmem:[#allocation2 + $0x8] sm:$0xff] %v651
        %684 = vst [vmem:[#allocation2 + $0x10] sm:$0xff] %v652
        %685 = vst [vmem:[#allocation2 + $0x18] sm:$0xff] %v653
        %686 = vst [vmem:[#allocation2 + $0x20] sm:$0xff] %v654
        %687 = vst [vmem:[#allocation2 + $0x28] sm:$0xff] %v655
        %688 = vst [vmem:[#allocation2 + $0x30] sm:$0xff] %v656
        %689 = vst [vmem:[#allocation2 + $0x38] sm:$0xff] %v657
        %690 = vst [vmem:[#allocation2 + $0x40] sm:$0xff] %v658
        %691 = vst [vmem:[#allocation2 + $0x48] sm:$0xff] %v659
        %692 = vst [vmem:[#allocation2 + $0x50] sm:$0xff] %v660
        %693 = vst [vmem:[#allocation2 + $0x58] sm:$0xff] %v661
        %694 = vst [vmem:[#allocation2 + $0x60] sm:$0xff] %v662
        %695 = vst [vmem:[#allocation2 + $0x68] sm:$0xff] %v663
        %696 = vst [vmem:[#allocation2 + $0x70] sm:$0xff] %v664
        %697 = vst [vmem:[#allocation2 + $0x78] sm:$0xff] %v665
        %698 = vst [vmem:[#allocation2 + $0x80] sm:$0xff] %v666
        %699 = vst [vmem:[#allocation2 + $0x88] sm:$0xff] %v667
        %700 = vst [vmem:[#allocation2 + $0x90] sm:$0xff] %v668
        %701 = vst [vmem:[#allocation2 + $0x98] sm:$0xff] %v669
        %702 = vst [vmem:[#allocation2 + $0xa0] sm:$0xff] %v670
        %703 = vst [vmem:[#allocation2 + $0xa8] sm:$0xff] %v671
        %704 = vst [vmem:[#allocation2 + $0xb0] sm:$0xff] %v672
        %705 = vst [vmem:[#allocation2 + $0xb8] sm:$0xff] %v673
        %706 = vst [vmem:[#allocation2 + $0xc0] sm:$0xff] %v674
        %707 = vst [vmem:[#allocation2 + $0xc8] sm:$0xff] %v675
        %708 = vst [vmem:[#allocation2 + $0xd0] sm:$0xff] %v676
        %709 = vst [vmem:[#allocation2 + $0xd8] sm:$0xff] %v677
        %710 = vst [vmem:[#allocation2 + $0xe0] sm:$0xff] %v678
        %711 = vst [vmem:[#allocation2 + $0xe8] sm:$0xff] %v679
        %712 = vst [vmem:[#allocation2 + $0xf0] sm:$0xff] %v680
        %713 = vst [vmem:[#allocation2 + $0xf8] sm:$0xff] %v681
        // Predicated region
        $region37: #{conv_bn.1} parent=31 // pred_check
          %p714 = pneg %p252
        $region38: #{conv_bn.1} parent=31 // pred_check_branch
          %716 = sbr.rel (%p714) target = $region40
        $region39: #{conv_bn.1} parent=31 // pred_region
          %v717 = vld [vmem:[#allocation2] sm:$0xff]
          %v718 = vld [vmem:[#allocation2 + $0x8] sm:$0xff]
          %v719 = vld [vmem:[#allocation2 + $0x10] sm:$0xff]
          %v720 = vld [vmem:[#allocation2 + $0x18] sm:$0xff]
          %v721 = vld [vmem:[#allocation2 + $0x20] sm:$0xff]
          %v722 = vld [vmem:[#allocation2 + $0x28] sm:$0xff]
          %v723 = vld [vmem:[#allocation2 + $0x30] sm:$0xff]
          %v724 = vld [vmem:[#allocation2 + $0x38] sm:$0xff]
          %v725 = vld [vmem:[#allocation2 + $0x40] sm:$0xff]
          %v726 = vld [vmem:[#allocation2 + $0x48] sm:$0xff]
          %v727 = vld [vmem:[#allocation2 + $0x50] sm:$0xff]
          %v728 = vld [vmem:[#allocation2 + $0x58] sm:$0xff]
          %v729 = vld [vmem:[#allocation2 + $0x60] sm:$0xff]
          %v730 = vld [vmem:[#allocation2 + $0x68] sm:$0xff]
          %v731 = vld [vmem:[#allocation2 + $0x70] sm:$0xff]
          %v732 = vld [vmem:[#allocation2 + $0x78] sm:$0xff]
          %v733 = vld [vmem:[#allocation2 + $0x80] sm:$0xff]
          %v734 = vld [vmem:[#allocation2 + $0x88] sm:$0xff]
          %v735 = vld [vmem:[#allocation2 + $0x90] sm:$0xff]
          %v736 = vld [vmem:[#allocation2 + $0x98] sm:$0xff]
          %v737 = vld [vmem:[#allocation2 + $0xa0] sm:$0xff]
          %v738 = vld [vmem:[#allocation2 + $0xa8] sm:$0xff]
          %v739 = vld [vmem:[#allocation2 + $0xb0] sm:$0xff]
          %v740 = vld [vmem:[#allocation2 + $0xb8] sm:$0xff]
          %v741 = vld [vmem:[#allocation2 + $0xc0] sm:$0xff]
          %v742 = vld [vmem:[#allocation2 + $0xc8] sm:$0xff]
          %v743 = vld [vmem:[#allocation2 + $0xd0] sm:$0xff]
          %v744 = vld [vmem:[#allocation2 + $0xd8] sm:$0xff]
          %v745 = vld [vmem:[#allocation2 + $0xe0] sm:$0xff]
          %v746 = vld [vmem:[#allocation2 + $0xe8] sm:$0xff]
          %v747 = vld [vmem:[#allocation2 + $0xf0] sm:$0xff]
          %v748 = vld [vmem:[#allocation2 + $0xf8] sm:$0xff]
          %v749 = vld [vmem:[%s249] sm:$0x1]
          %v751 = vlaneseq
          %v752 = vshrl.u32 %v751, 7
          %v753 = vsub.s32 0, %v752
          %v754 = vrot.slane %v749, %v753
          %v756 = vadd.f32 %v717, %v754
          %v757 = vadd.f32 %v718, %v754
          %v758 = vadd.f32 %v719, %v754
          %v759 = vadd.f32 %v720, %v754
          %v760 = vadd.f32 %v721, %v754
          %v761 = vadd.f32 %v722, %v754
          %v762 = vadd.f32 %v723, %v754
          %v763 = vadd.f32 %v724, %v754
          %v764 = vadd.f32 %v725, %v754
          %v765 = vadd.f32 %v726, %v754
          %v766 = vadd.f32 %v727, %v754
          %v767 = vadd.f32 %v728, %v754
          %v768 = vadd.f32 %v729, %v754
          %v769 = vadd.f32 %v730, %v754
          %v770 = vadd.f32 %v731, %v754
          %v771 = vadd.f32 %v732, %v754
          %v772 = vadd.f32 %v733, %v754
          %v773 = vadd.f32 %v734, %v754
          %v774 = vadd.f32 %v735, %v754
          %v775 = vadd.f32 %v736, %v754
          %v776 = vadd.f32 %v737, %v754
          %v777 = vadd.f32 %v738, %v754
          %v778 = vadd.f32 %v739, %v754
          %v779 = vadd.f32 %v740, %v754
          %v780 = vadd.f32 %v741, %v754
          %v781 = vadd.f32 %v742, %v754
          %v782 = vadd.f32 %v743, %v754
          %v783 = vadd.f32 %v744, %v754
          %v784 = vadd.f32 %v745, %v754
          %v785 = vadd.f32 %v746, %v754
          %v786 = vadd.f32 %v747, %v754
          %v787 = vadd.f32 %v748, %v754
          %v788 = vsub.f32 0.0, %v756
          %v789 = vsub.f32 0.0, %v757
          %v790 = vsub.f32 0.0, %v758
          %v791 = vsub.f32 0.0, %v759
          %v792 = vsub.f32 0.0, %v760
          %v793 = vsub.f32 0.0, %v761
          %v794 = vsub.f32 0.0, %v762
          %v795 = vsub.f32 0.0, %v763
          %v796 = vsub.f32 0.0, %v764
          %v797 = vsub.f32 0.0, %v765
          %v798 = vsub.f32 0.0, %v766
          %v799 = vsub.f32 0.0, %v767
          %v800 = vsub.f32 0.0, %v768
          %v801 = vsub.f32 0.0, %v769
          %v802 = vsub.f32 0.0, %v770
          %v803 = vsub.f32 0.0, %v771
          %v804 = vsub.f32 0.0, %v772
          %v805 = vsub.f32 0.0, %v773
          %v806 = vsub.f32 0.0, %v774
          %v807 = vsub.f32 0.0, %v775
          %v808 = vsub.f32 0.0, %v776
          %v809 = vsub.f32 0.0, %v777
          %v810 = vsub.f32 0.0, %v778
          %v811 = vsub.f32 0.0, %v779
          %v812 = vsub.f32 0.0, %v780
          %v813 = vsub.f32 0.0, %v781
          %v814 = vsub.f32 0.0, %v782
          %v815 = vsub.f32 0.0, %v783
          %v816 = vsub.f32 0.0, %v784
          %v817 = vsub.f32 0.0, %v785
          %v818 = vsub.f32 0.0, %v786
          %v819 = vsub.f32 0.0, %v787
          %v820 = vmul.f32 %v788, 1.442695
          %v821 = vpow.pop %v820
          %v822 = vmul.f32 %v789, 1.442695
          %v823 = vpow.pop %v822
          %v824 = vmul.f32 %v790, 1.442695
          %v825 = vpow.pop %v824
          %v826 = vmul.f32 %v791, 1.442695
          %v827 = vpow.pop %v826
          %v828 = vmul.f32 %v792, 1.442695
          %v829 = vpow.pop %v828
          %v830 = vmul.f32 %v793, 1.442695
          %v831 = vpow.pop %v830
          %v832 = vmul.f32 %v794, 1.442695
          %v833 = vpow.pop %v832
          %v834 = vmul.f32 %v795, 1.442695
          %v835 = vpow.pop %v834
          %v836 = vmul.f32 %v796, 1.442695
          %v837 = vpow.pop %v836
          %v838 = vmul.f32 %v797, 1.442695
          %v839 = vpow.pop %v838
          %v840 = vmul.f32 %v798, 1.442695
          %v841 = vpow.pop %v840
          %v842 = vmul.f32 %v799, 1.442695
          %v843 = vpow.pop %v842
          %v844 = vmul.f32 %v800, 1.442695
          %v845 = vpow.pop %v844
          %v846 = vmul.f32 %v801, 1.442695
          %v847 = vpow.pop %v846
          %v848 = vmul.f32 %v802, 1.442695
          %v849 = vpow.pop %v848
          %v850 = vmul.f32 %v803, 1.442695
          %v851 = vpow.pop %v850
          %v852 = vmul.f32 %v804, 1.442695
          %v853 = vpow.pop %v852
          %v854 = vmul.f32 %v805, 1.442695
          %v855 = vpow.pop %v854
          %v856 = vmul.f32 %v806, 1.442695
          %v857 = vpow.pop %v856
          %v858 = vmul.f32 %v807, 1.442695
          %v859 = vpow.pop %v858
          %v860 = vmul.f32 %v808, 1.442695
          %v861 = vpow.pop %v860
          %v862 = vmul.f32 %v809, 1.442695
          %v863 = vpow.pop %v862
          %v864 = vmul.f32 %v810, 1.442695
          %v865 = vpow.pop %v864
          %v866 = vmul.f32 %v811, 1.442695
          %v867 = vpow.pop %v866
          %v868 = vmul.f32 %v812, 1.442695
          %v869 = vpow.pop %v868
          %v870 = vmul.f32 %v813, 1.442695
          %v871 = vpow.pop %v870
          %v872 = vmul.f32 %v814, 1.442695
          %v873 = vpow.pop %v872
          %v874 = vmul.f32 %v815, 1.442695
          %v875 = vpow.pop %v874
          %v876 = vmul.f32 %v816, 1.442695
          %v877 = vpow.pop %v876
          %v878 = vmul.f32 %v817, 1.442695
          %v879 = vpow.pop %v878
          %v880 = vmul.f32 %v818, 1.442695
          %v881 = vpow.pop %v880
          %v882 = vmul.f32 %v819, 1.442695
          %v883 = vpow.pop %v882
          %v884 = vadd.f32 %v821, 1.0
          %v885 = vadd.f32 %v823, 1.0
          %v886 = vadd.f32 %v825, 1.0
          %v887 = vadd.f32 %v827, 1.0
          %v888 = vadd.f32 %v829, 1.0
          %v889 = vadd.f32 %v831, 1.0
          %v890 = vadd.f32 %v833, 1.0
          %v891 = vadd.f32 %v835, 1.0
          %v892 = vadd.f32 %v837, 1.0
          %v893 = vadd.f32 %v839, 1.0
          %v894 = vadd.f32 %v841, 1.0
          %v895 = vadd.f32 %v843, 1.0
          %v896 = vadd.f32 %v845, 1.0
          %v897 = vadd.f32 %v847, 1.0
          %v898 = vadd.f32 %v849, 1.0
          %v899 = vadd.f32 %v851, 1.0
          %v900 = vadd.f32 %v853, 1.0
          %v901 = vadd.f32 %v855, 1.0
          %v902 = vadd.f32 %v857, 1.0
          %v903 = vadd.f32 %v859, 1.0
          %v904 = vadd.f32 %v861, 1.0
          %v905 = vadd.f32 %v863, 1.0
          %v906 = vadd.f32 %v865, 1.0
          %v907 = vadd.f32 %v867, 1.0
          %v908 = vadd.f32 %v869, 1.0
          %v909 = vadd.f32 %v871, 1.0
          %v910 = vadd.f32 %v873, 1.0
          %v911 = vadd.f32 %v875, 1.0
          %v912 = vadd.f32 %v877, 1.0
          %v913 = vadd.f32 %v879, 1.0
          %v914 = vadd.f32 %v881, 1.0
          %v915 = vadd.f32 %v883, 1.0
          %v916 = vrcp.pop %v884
          %v917 = vmul.f32 1.0, %v916
          %v918 = vrcp.pop %v885
          %v919 = vmul.f32 1.0, %v918
          %v920 = vrcp.pop %v886
          %v921 = vmul.f32 1.0, %v920
          %v922 = vrcp.pop %v887
          %v923 = vmul.f32 1.0, %v922
          %v924 = vrcp.pop %v888
          %v925 = vmul.f32 1.0, %v924
          %v926 = vrcp.pop %v889
          %v927 = vmul.f32 1.0, %v926
          %v928 = vrcp.pop %v890
          %v929 = vmul.f32 1.0, %v928
          %v930 = vrcp.pop %v891
          %v931 = vmul.f32 1.0, %v930
          %v932 = vrcp.pop %v892
          %v933 = vmul.f32 1.0, %v932
          %v934 = vrcp.pop %v893
          %v935 = vmul.f32 1.0, %v934
          %v936 = vrcp.pop %v894
          %v937 = vmul.f32 1.0, %v936
          %v938 = vrcp.pop %v895
          %v939 = vmul.f32 1.0, %v938
          %v940 = vrcp.pop %v896
          %v941 = vmul.f32 1.0, %v940
          %v942 = vrcp.pop %v897
          %v943 = vmul.f32 1.0, %v942
          %v944 = vrcp.pop %v898
          %v945 = vmul.f32 1.0, %v944
          %v946 = vrcp.pop %v899
          %v947 = vmul.f32 1.0, %v946
          %v948 = vrcp.pop %v900
          %v949 = vmul.f32 1.0, %v948
          %v950 = vrcp.pop %v901
          %v951 = vmul.f32 1.0, %v950
          %v952 = vrcp.pop %v902
          %v953 = vmul.f32 1.0, %v952
          %v954 = vrcp.pop %v903
          %v955 = vmul.f32 1.0, %v954
          %v956 = vrcp.pop %v904
          %v957 = vmul.f32 1.0, %v956
          %v958 = vrcp.pop %v905
          %v959 = vmul.f32 1.0, %v958
          %v960 = vrcp.pop %v906
          %v961 = vmul.f32 1.0, %v960
          %v962 = vrcp.pop %v907
          %v963 = vmul.f32 1.0, %v962
          %v964 = vrcp.pop %v908
          %v965 = vmul.f32 1.0, %v964
          %v966 = vrcp.pop %v909
          %v967 = vmul.f32 1.0, %v966
          %v968 = vrcp.pop %v910
          %v969 = vmul.f32 1.0, %v968
          %v970 = vrcp.pop %v911
          %v971 = vmul.f32 1.0, %v970
          %v972 = vrcp.pop %v912
          %v973 = vmul.f32 1.0, %v972
          %v974 = vrcp.pop %v913
          %v975 = vmul.f32 1.0, %v974
          %v976 = vrcp.pop %v914
          %v977 = vmul.f32 1.0, %v976
          %v978 = vrcp.pop %v915
          %v979 = vmul.f32 1.0, %v978
          %v980 = vmul.f32 %v756, %v917
          %v981 = vmul.f32 %v757, %v919
          %v982 = vmul.f32 %v758, %v921
          %v983 = vmul.f32 %v759, %v923
          %v984 = vmul.f32 %v760, %v925
          %v985 = vmul.f32 %v761, %v927
          %v986 = vmul.f32 %v762, %v929
          %v987 = vmul.f32 %v763, %v931
          %v988 = vmul.f32 %v764, %v933
          %v989 = vmul.f32 %v765, %v935
          %v990 = vmul.f32 %v766, %v937
          %v991 = vmul.f32 %v767, %v939
          %v992 = vmul.f32 %v768, %v941
          %v993 = vmul.f32 %v769, %v943
          %v994 = vmul.f32 %v770, %v945
          %v995 = vmul.f32 %v771, %v947
          %v996 = vmul.f32 %v772, %v949
          %v997 = vmul.f32 %v773, %v951
          %v998 = vmul.f32 %v774, %v953
          %v999 = vmul.f32 %v775, %v955
          %v1000 = vmul.f32 %v776, %v957
          %v1001 = vmul.f32 %v777, %v959
          %v1002 = vmul.f32 %v778, %v961
          %v1003 = vmul.f32 %v779, %v963
          %v1004 = vmul.f32 %v780, %v965
          %v1005 = vmul.f32 %v781, %v967
          %v1006 = vmul.f32 %v782, %v969
          %v1007 = vmul.f32 %v783, %v971
          %v1008 = vmul.f32 %v784, %v973
          %v1009 = vmul.f32 %v785, %v975
          %v1010 = vmul.f32 %v786, %v977
          %v1011 = vmul.f32 %v787, %v979
          %1012 = vst [vmem:[%s228] sm:$0xff] %v980
          %1013 = vst [vmem:[%s228 + $0x8] sm:$0xff] %v981
          %1014 = vst [vmem:[%s228 + $0x10] sm:$0xff] %v982
          %1015 = vst [vmem:[%s228 + $0x18] sm:$0xff] %v983
          %1016 = vst [vmem:[%s228 + $0x20] sm:$0xff] %v984
          %1017 = vst [vmem:[%s228 + $0x28] sm:$0xff] %v985
          %1018 = vst [vmem:[%s228 + $0x30] sm:$0xff] %v986
          %1019 = vst [vmem:[%s228 + $0x38] sm:$0xff] %v987
          %1020 = vst [vmem:[%s228 + $0x40] sm:$0xff] %v988
          %1021 = vst [vmem:[%s228 + $0x48] sm:$0xff] %v989
          %1022 = vst [vmem:[%s228 + $0x50] sm:$0xff] %v990
          %1023 = vst [vmem:[%s228 + $0x58] sm:$0xff] %v991
          %1024 = vst [vmem:[%s228 + $0x60] sm:$0xff] %v992
          %1025 = vst [vmem:[%s228 + $0x68] sm:$0xff] %v993
          %1026 = vst [vmem:[%s228 + $0x70] sm:$0xff] %v994
          %1027 = vst [vmem:[%s228 + $0x78] sm:$0xff] %v995
          %1028 = vst [vmem:[%s228 + $0x80] sm:$0xff] %v996
          %1029 = vst [vmem:[%s228 + $0x88] sm:$0xff] %v997
          %1030 = vst [vmem:[%s228 + $0x90] sm:$0xff] %v998
          %1031 = vst [vmem:[%s228 + $0x98] sm:$0xff] %v999
          %1032 = vst [vmem:[%s228 + $0xa0] sm:$0xff] %v1000
          %1033 = vst [vmem:[%s228 + $0xa8] sm:$0xff] %v1001
          %1034 = vst [vmem:[%s228 + $0xb0] sm:$0xff] %v1002
          %1035 = vst [vmem:[%s228 + $0xb8] sm:$0xff] %v1003
          %1036 = vst [vmem:[%s228 + $0xc0] sm:$0xff] %v1004
          %1037 = vst [vmem:[%s228 + $0xc8] sm:$0xff] %v1005
          %1038 = vst [vmem:[%s228 + $0xd0] sm:$0xff] %v1006
          %1039 = vst [vmem:[%s228 + $0xd8] sm:$0xff] %v1007
          %1040 = vst [vmem:[%s228 + $0xe0] sm:$0xff] %v1008
          %1041 = vst [vmem:[%s228 + $0xe8] sm:$0xff] %v1009
          %1042 = vst [vmem:[%s228 + $0xf0] sm:$0xff] %v1010
          %1043 = vst [vmem:[%s228 + $0xf8] sm:$0xff] %v1011
        $region40: #{conv_bn.1} parent=31 // pred_fallthru
          _
        %s1044 = sand.u32 %s128, 1
        %s1045 = scalar_lea.sflag [#allocation4], %s1044
        %s1046 = sand.u32 %s128, 1
        %s1047 = smul.addr %s1046, 256
        %s1048 = scalar_lea.vmem [#allocation3], %s1047
        // Predicated region
        $region41: #{conv_bn.1} parent=31 // pred_check
          %p1049 = pneg %p138
        $region42: #{conv_bn.1} parent=31 // pred_check_branch
          %1051 = sbr.rel (%p1049) target = $region44
        $region43: #{conv_bn.1} parent=31 // pred_region
          %s1052 = smul.u32 32, %s22
          %s1054 = ssub.s32 4096, 4096
          %1055 = vsyncadd %s1045, %s1054
          %s1056 = sadd.s32 %s23, %s1052
          %s1057 = smul.addr %s1056, 128
          %s1058 = scalar_lea.hbm %s3, %s1057
          %s1059 = sshll.u32 %s1048, 4
          %s1060 = int_to_ptr.vmem [resolvable:$true] %s1059
          %1065 = dma.vmem_to_hbm [thread:$0]  %s1060, 4096, %s1058, %s1045, 128, 128, 8
        $region44: #{conv_bn.1} parent=31 // pred_fallthru
          _
      $region32: #{conv_bn.1} parent=5 // pred_fallthru
        _
      %p1066 = scmp.le.s32.totalorder 2, %s12
      // Predicated region
      $region45: #{conv_bn.1} parent=5 // pred_check
        %p1067 = pneg %p1066
      $region46: #{conv_bn.1} parent=5 // pred_check_branch
        %1069 = sbr.rel (%p1067) target = $region48
      $region47: #{conv_bn.1} parent=5 // pred_region
        %s1070 = ssub.s32 %s12, 2
        // Predicated region
        $region49: #{conv_bn.1} parent=47 // pred_check
          %p1071 = pneg %p144
        $region50: #{conv_bn.1} parent=47 // pred_check_branch
          %1073 = sbr.rel (%p1071) target = $region52
        $region51: #{conv_bn.1} parent=47 // pred_region
          %s1074 = sand.u32 %s129, 1
          %s1075 = scalar_lea.sflag [#allocation4], %s1074
          %s1076 = sand.u32 %s129, 1
          %s1077 = smul.addr %s1076, 256
          %s1078 = scalar_lea.vmem [#allocation3], %s1077
          %1079 = dma.done %s1075, 4096
        $region52: #{conv_bn.1} parent=47 // pred_fallthru
          _
      $region48: #{conv_bn.1} parent=5 // pred_fallthru
        _
    $region6: #{conv_bn.1} parent=1 // loop_footer
      %s16 = sadd.s32 1, %s12
    $region7: #{conv_bn.1} parent=1 // loop_footer_branch
      %11 = sbr.rel target = $region3
    $region8: #{conv_bn.1} parent=1 // loop_exit
      _
    %1080 = vsyncpa [#allocation4], 1
    %s1081 = scalar_lea.sflag [#allocation4], 1
    %1082 = vsyncpa %s1081, 1

</llo_original>
